<compile_context>
chip_gen: v5e
topology: v5e:2x2
jax: 0.10.0
libtpu: 0.0.40
codegen_flags: <defaults>
</compile_context>

<pallas_src>
import jax
import jax.numpy as jnp
from jax.experimental import pallas as pl
from jax.experimental.pallas import tpu as pltpu


def conv_bn_silu_kernel(main_ref, halo_ref, w_ref, scale_ref, bias_ref, o_ref, acc_ref):
    # main_ref : (1, TH*W_p, KW*Cin)   dx-folded patch rows owned by this row tile
    # halo_ref : (1, 1, 2*W_p, KW*Cin) the 2 patch rows just below the tile (dy halo)
    # w_ref    : (KH, KW*Cin, Cout_p)  conv weights, dx folded into K, Cout padded
    # scale_ref: (1, Cout_p)           folded BatchNorm scale (f32)
    # bias_ref : (1, Cout_p)           folded BatchNorm bias  (f32)
    # o_ref    : (1, TH*W_p, Cout_p)   lane-dense output block (out dtype)
    # acc_ref  : (TH*W_p, Cout_p) f32  VMEM accumulator scratch
    KH = w_ref.shape[0]
    R = acc_ref.shape[0]                      # TH * W_p output rows in this tile
    Wp = halo_ref.shape[2] // (KH - 1)        # padded image width

    m = main_ref[0]                           # (R, KW*Cin)
    hl = halo_ref[0, 0]                       # (2*W_p, KW*Cin)

    # dy = 0: every output row reads its own patch row -> one full-size MXU dot.
    acc_ref[...] = jnp.dot(m, w_ref[0], preferred_element_type=jnp.float32)

    # dy >= 1: output row j reads patch row j + dy*W_p.  The first R - dy*W_p output
    # rows read the main block; the last dy*W_p rows read the halo.  Every slice offset
    # is a multiple of W_p (itself a multiple of the sublane pack) -> aligned, copy-free.
    for dy in range(1, KH):
        off = dy * Wp
        if off < R:
            acc_ref[:R - off, :] += jnp.dot(m[off:, :], w_ref[dy],
                                            preferred_element_type=jnp.float32)
        acc_ref[R - off:, :] += jnp.dot(hl[:off, :], w_ref[dy],
                                        preferred_element_type=jnp.float32)

    # Folded BatchNorm (inference) + SiLU, in f32, on the lane-dense layout.
    # TODO(synk): if a bundle dump shows VALU as the saturating slot, switch to
    #             y * pl.reciprocal(1 + jnp.exp(-y), approx=True) to push work onto EUP.
    y = acc_ref[...] * scale_ref[...] + bias_ref[...]
    y = y * jax.nn.sigmoid(y)
    o_ref[...] = y.reshape(o_ref.shape).astype(o_ref.dtype)


def _itemsize(dt):
    return jnp.dtype(dt).itemsize


def conv_block_3x3(x_nchw, weight_oihw, gamma, beta, running_mean, running_var,
                   eps=1e-5, compute_dtype=jnp.bfloat16, out_dtype=None, row_tile=None):
    """Conv2d(3x3, s=1, p=1, bias=False) -> BatchNorm2d (inference) -> SiLU."""
    N, Cin, H, W = x_nchw.shape
    Cout, Cin_w, KH, KW = weight_oihw.shape
    assert (KH, KW) == (3, 3) and Cin_w == Cin, "groups != 1 / non-3x3 not supported"
    if out_dtype is None:
        out_dtype = compute_dtype          # bf16 by default: halves writeback; the next
                                           # layer wants bf16 MXU operands anyway.

    Cout_p = ((Cout + 127) // 128) * 128   # lane-dense MXU N dim / unmasked 128-lane stores
    K = KW * Cin                           # dx-folded contraction depth

    # Pad the image width so dy*W_p offsets are sublane aligned (no relayout per dot).
    pack = 16 if _itemsize(compute_dtype) == 2 else 8
    W_p = ((W + pack - 1) // pack) * pack

    # ---- row-tile size: bound live VMEM per grid step ----------------------------------
    if row_tile is None:
        # Target ~8k output pixels per step (>=512 sublane rows, amortizes per-step
        # overhead / long DMA bursts on v5e/v6e), then shrink to a ~28 MiB live budget
        # so a tile is always safe inside v7x's 64 MiB physical VMEM.
        TH = max(2, min(H, max(1, 8192 // W_p)))

        def live_vmem(th):
            rows = th * W_p
            return (2 * rows * K * _itemsize(compute_dtype)            # main (dbl-buf)
                    + 2 * 2 * W_p * K * _itemsize(compute_dtype)       # halo (dbl-buf)
                    + 2 * KH * K * Cout_p * _itemsize(compute_dtype)   # weights
                    + 2 * rows * Cout_p * _itemsize(out_dtype)         # output (dbl-buf)
                    + rows * Cout_p * 4)                               # f32 accumulator

        while TH > 2 and live_vmem(TH) > 28 * 1024 * 1024:
            TH = max(2, TH // 2)
        row_tile = TH
    TH = max(2, min(row_tile, max(H, 2)))
    n_h = -(-H // TH)                      # row tiles (keep even on v7x for 2-TC balance)
    H_p = n_h * TH

    # ---- wrapper glue (fuses under jit with the NCHW->NHWC transpose the API forces) ----
    x = jnp.transpose(x_nchw, (0, 2, 3, 1))                               # (N, H, W, Cin)
    # conv zero-pad (1 top/left) + alignment/tiling zero-pad (bottom/right).
    x = jnp.pad(x, ((0, 0), (1, H_p + 1 - H), (1, W_p + 1 - W), (0, 0)))  # (N,H_p+2,W_p+2,Cin)
    # dx-fold (im2col along the width taps): (N, H_p+2, W_p, KW*Cin)
    patch = jnp.concatenate([x[:, :, dx:dx + W_p, :] for dx in range(KW)], axis=-1)
    patch = patch.astype(compute_dtype)
    # TODO(synk): move this dx-fold in-kernel for large mem-bound layers (see header).
    main = patch[:, :H_p].reshape(N, H_p * W_p, K)
    # 2-row dy halo below each row tile (only 2*W_p rows per tile duplicated in HBM).
    halo = jnp.stack(
        [patch[:, (h + 1) * TH:(h + 1) * TH + 2] for h in range(n_h)], axis=1
    ).reshape(N, n_h, 2 * W_p, K)

    # Weights: OIHW -> (KH, KW*Cin, Cout), dx folded into K, Cout zero-padded to Cout_p.
    w = jnp.transpose(weight_oihw, (2, 3, 1, 0)).reshape(KH, K, Cout)
    w = jnp.pad(w, ((0, 0), (0, 0), (0, Cout_p - Cout))).astype(compute_dtype)

    # Folded inference-mode BatchNorm (f32 scale/bias applied on the f32 accumulator).
    inv_std = 1.0 / jnp.sqrt(running_var.astype(jnp.float32) + eps)
    scale = gamma.astype(jnp.float32) * inv_std
    bias = beta.astype(jnp.float32) - running_mean.astype(jnp.float32) * scale
    scale = jnp.pad(scale, (0, Cout_p - Cout)).reshape(1, Cout_p)
    bias = jnp.pad(bias, (0, Cout_p - Cout)).reshape(1, Cout_p)

    out = pl.pallas_call(
        conv_bn_silu_kernel,
        out_shape=jax.ShapeDtypeStruct((N, H_p * W_p, Cout_p), out_dtype),
        grid_spec=pltpu.PrefetchScalarGridSpec(
            num_scalar_prefetch=0,
            grid=(N, n_h),
            in_specs=[
                pl.BlockSpec((1, TH * W_p, K), lambda n, h: (n, h, 0)),
                pl.BlockSpec((1, 1, 2 * W_p, K), lambda n, h: (n, h, 0, 0)),
                # Constant-index inputs below are fetched only once by the pipeline.
                # TODO(synk): v7x -> pipeline_mode=pl.Buffered(1) to drop their 2nd buffer.
                pl.BlockSpec((KH, K, Cout_p), lambda n, h: (0, 0, 0)),
                pl.BlockSpec((1, Cout_p), lambda n, h: (0, 0)),
                pl.BlockSpec((1, Cout_p), lambda n, h: (0, 0)),
            ],
            out_specs=pl.BlockSpec((1, TH * W_p, Cout_p), lambda n, h: (n, h, 0)),
            scratch_shapes=[pltpu.VMEM((TH * W_p, Cout_p), jnp.float32)],
        ),
        compiler_params=pltpu.CompilerParams(
            # Batch and row-tile axes are fully independent -> both "parallel"
            # (v7x megacore gets work even at inference batch 1).
            dimension_semantics=("parallel", "parallel"),
            # <= ~56 MiB keeps headroom inside v7x's 64 MiB physical VMEM; on v5e/v6e
            # (128 MiB) this and the row tile can both be raised for longer DMA bursts.
            vmem_limit_bytes=48 * 1024 * 1024,
        ),
    )(main, halo, w, scale, bias)

    # Un-pad (H, W, Cout) and restore NCHW.  Fuses into the output copy under jit.
    out = out.reshape(N, H_p, W_p, Cout_p)[:, :H, :W, :Cout]
    return jnp.transpose(out, (0, 3, 1, 2))


def _reference(x_nchw, weight_oihw, gamma, beta, running_mean, running_var, eps=1e-5):
    y = jax.lax.conv_general_dilated(
        x_nchw, weight_oihw, window_strides=(1, 1), padding=((1, 1), (1, 1)),
        dimension_numbers=("NCHW", "OIHW", "NCHW"))
    inv_std = 1.0 / jnp.sqrt(running_var + eps)
    s = (gamma * inv_std)[None, :, None, None]
    b = (beta - running_mean * gamma * inv_std)[None, :, None, None]
    y = y * s + b
    return y * jax.nn.sigmoid(y)


if __name__ == "__main__":
    key = jax.random.PRNGKey(0)
    kx, kw, kg, kb, km, kv = jax.random.split(key, 6)

    N, Cin, Cout, H, W = 2, 4, 8, 16, 16
    x = jax.random.normal(kx, (N, Cin, H, W), dtype=jnp.float32)
    weight = jax.random.normal(kw, (Cout, Cin, 3, 3), dtype=jnp.float32) * 0.1
    gamma = jax.random.normal(kg, (Cout,), dtype=jnp.float32) * 0.1 + 1.0
    beta = jax.random.normal(kb, (Cout,), dtype=jnp.float32) * 0.1
    running_mean = jax.random.normal(km, (Cout,), dtype=jnp.float32) * 0.1
    running_var = jax.random.uniform(kv, (Cout,), dtype=jnp.float32,
                                     minval=0.5, maxval=1.5)

    ref = _reference(x, weight, gamma, beta, running_mean, running_var)

    # Exact-precision path (f32 MXU operands, f32 output), row-tiled: 2 tiles of 8 rows.
    run_f32 = jax.jit(lambda *a: conv_block_3x3(*a, compute_dtype=jnp.float32, row_tile=8))
    out_f32 = jax.block_until_ready(
        run_f32(x, weight, gamma, beta, running_mean, running_var))
    assert out_f32.shape == (N, Cout, H, W)
    assert jnp.allclose(out_f32, ref, rtol=1e-4, atol=1e-4), "f32 path mismatch"

    # Fast path: bf16 MXU operands + bf16 output, f32 accumulation + f32 BN/SiLU epilogue.
    run_bf16 = jax.jit(lambda *a: conv_block_3x3(*a, row_tile=8))
    out_bf16 = jax.block_until_ready(
        run_bf16(x, weight, gamma, beta, running_mean, running_var))
    assert out_bf16.shape == (N, Cout, H, W)
    assert out_bf16.dtype == jnp.bfloat16
    assert jnp.allclose(out_bf16.astype(jnp.float32), ref,
                        rtol=3e-2, atol=3e-2), "bf16 path mismatch"

    # Default tile-size heuristic (collapses to a single row tile at this toy size).
    run_auto = jax.jit(lambda *a: conv_block_3x3(*a))
    out_auto = jax.block_until_ready(
        run_auto(x, weight, gamma, beta, running_mean, running_var))
    assert jnp.allclose(out_auto.astype(jnp.float32), ref,
                        rtol=3e-2, atol=3e-2), "auto-tile path mismatch"

    print("KERNEL_OK")
</pallas_src>

<mosaic_0001>
module attributes {stable_mosaic.version = 11 : i64} {
  func.func @conv_bn_silu_kernel(%arg0: i32, %arg1: i32, %arg2: memref<1x128x12xf32, #tpu.memory_space<vmem>>, %arg3: memref<1x1x32x12xf32, #tpu.memory_space<vmem>>, %arg4: memref<3x12x128xf32, #tpu.memory_space<vmem>>, %arg5: memref<1x128xf32, #tpu.memory_space<vmem>>, %arg6: memref<1x128xf32, #tpu.memory_space<vmem>>, %arg7: memref<1x128x128xf32, #tpu.memory_space<vmem>>, %arg8: memref<128x128xf32, #tpu.memory_space<vmem>>) attributes {dimension_semantics = [#tpu.dimension_semantics<parallel>, #tpu.dimension_semantics<parallel>], iteration_bounds = array<i64: 2, 2>, scalar_prefetch = 0 : i64, scratch_operands = 1 : i64, tpu.core_type = #tpu.core_type<tc>, window_params = [{transform_indices = @transform_0, window_bounds = array<i64: 1, 128, 12>}, {transform_indices = @transform_1, window_bounds = array<i64: 1, 1, 32, 12>}, {pipeline_mode = #tpu.pipeline_mode<synchronous>, transform_indices = @transform_2, window_bounds = array<i64: 3, 12, 128>}, {pipeline_mode = #tpu.pipeline_mode<synchronous>, transform_indices = @transform_3, window_bounds = array<i64: 1, 128>}, {pipeline_mode = #tpu.pipeline_mode<synchronous>, transform_indices = @transform_4, window_bounds = array<i64: 1, 128>}, {transform_indices = @transform_5, window_bounds = array<i64: 1, 128, 128>}]} {
    %c0 = arith.constant 0 : index
    %c0_0 = arith.constant 0 : index
    %c0_1 = arith.constant 0 : index
    %0 = vector.load %arg2[%c0, %c0_0, %c0_1] : memref<1x128x12xf32, #tpu.memory_space<vmem>>, vector<1x128x12xf32>
    %1 = vector.shape_cast %0 : vector<1x128x12xf32> to vector<128x12xf32>
    %c0_2 = arith.constant 0 : index
    %c0_3 = arith.constant 0 : index
    %c0_4 = arith.constant 0 : index
    %c0_5 = arith.constant 0 : index
    %2 = vector.load %arg3[%c0_2, %c0_3, %c0_4, %c0_5] : memref<1x1x32x12xf32, #tpu.memory_space<vmem>>, vector<1x1x32x12xf32>
    %3 = vector.shape_cast %2 : vector<1x1x32x12xf32> to vector<32x12xf32>
    %c0_6 = arith.constant 0 : index
    %c0_7 = arith.constant 0 : index
    %c0_8 = arith.constant 0 : index
    %4 = vector.load %arg4[%c0_6, %c0_7, %c0_8] : memref<3x12x128xf32, #tpu.memory_space<vmem>>, vector<1x12x128xf32>
    %5 = vector.shape_cast %4 : vector<1x12x128xf32> to vector<12x128xf32>
    %cst = arith.constant dense<0.000000e+00> : vector<128x128xf32>
    %6 = tpu.matmul %1, %5, %cst {dimension_numbers = #tpu.dot_dimension_numbers<[1], [0], [0], [1], [0, 0, 1, 1], [], []>} : vector<128x12xf32>, vector<12x128xf32>, vector<128x128xf32> -> vector<128x128xf32>
    %c0_9 = arith.constant 0 : index
    %c0_10 = arith.constant 0 : index
    %7 = vector.load %arg8[%c0_9, %c0_10] : memref<128x128xf32, #tpu.memory_space<vmem>>, vector<128x128xf32>
    tpu.vector_store %arg8[%c0_9, %c0_10], %6 {strides = array<i32>} : memref<128x128xf32, #tpu.memory_space<vmem>>, vector<128x128xf32>,
    %c0_11 = arith.constant 0 : index
    %c0_12 = arith.constant 0 : index
    %8 = vector.load %arg8[%c0_11, %c0_12] : memref<128x128xf32, #tpu.memory_space<vmem>>, vector<112x128xf32>
    %9 = vector.extract_strided_slice %1 {offsets = [16, 0], sizes = [112, 12], strides = [1, 1]} : vector<128x12xf32> to vector<112x12xf32>
    %c1 = arith.constant 1 : index
    %c0_13 = arith.constant 0 : index
    %c0_14 = arith.constant 0 : index
    %10 = vector.load %arg4[%c1, %c0_13, %c0_14] : memref<3x12x128xf32, #tpu.memory_space<vmem>>, vector<1x12x128xf32>
    %11 = vector.shape_cast %10 : vector<1x12x128xf32> to vector<12x128xf32>
    %cst_15 = arith.constant dense<0.000000e+00> : vector<112x128xf32>
    %12 = tpu.matmul %9, %11, %cst_15 {dimension_numbers = #tpu.dot_dimension_numbers<[1], [0], [0], [1], [0, 0, 1, 1], [], []>} : vector<112x12xf32>, vector<12x128xf32>, vector<112x128xf32> -> vector<112x128xf32>
    %13 = arith.addf %8, %12 : vector<112x128xf32>
    %c0_16 = arith.constant 0 : index
    %c0_17 = arith.constant 0 : index
    %14 = vector.load %arg8[%c0_16, %c0_17] : memref<128x128xf32, #tpu.memory_space<vmem>>, vector<112x128xf32>
    tpu.vector_store %arg8[%c0_16, %c0_17], %13 {strides = array<i32>} : memref<128x128xf32, #tpu.memory_space<vmem>>, vector<112x128xf32>,
    %c112 = arith.constant 112 : index
    %c0_18 = arith.constant 0 : index
    %15 = vector.load %arg8[%c112, %c0_18] : memref<128x128xf32, #tpu.memory_space<vmem>>, vector<16x128xf32>
    %16 = vector.extract_strided_slice %3 {offsets = [0, 0], sizes = [16, 12], strides = [1, 1]} : vector<32x12xf32> to vector<16x12xf32>
    %c1_19 = arith.constant 1 : index
    %c0_20 = arith.constant 0 : index
    %c0_21 = arith.constant 0 : index
    %17 = vector.load %arg4[%c1_19, %c0_20, %c0_21] : memref<3x12x128xf32, #tpu.memory_space<vmem>>, vector<1x12x128xf32>
    %18 = vector.shape_cast %17 : vector<1x12x128xf32> to vector<12x128xf32>
    %cst_22 = arith.constant dense<0.000000e+00> : vector<16x128xf32>
    %19 = tpu.matmul %16, %18, %cst_22 {dimension_numbers = #tpu.dot_dimension_numbers<[1], [0], [0], [1], [0, 0, 1, 1], [], []>} : vector<16x12xf32>, vector<12x128xf32>, vector<16x128xf32> -> vector<16x128xf32>
    %20 = arith.addf %15, %19 : vector<16x128xf32>
    %c112_23 = arith.constant 112 : index
    %c0_24 = arith.constant 0 : index
    %21 = vector.load %arg8[%c112_23, %c0_24] : memref<128x128xf32, #tpu.memory_space<vmem>>, vector<16x128xf32>
    tpu.vector_store %arg8[%c112_23, %c0_24], %20 {strides = array<i32>} : memref<128x128xf32, #tpu.memory_space<vmem>>, vector<16x128xf32>,
    %c0_25 = arith.constant 0 : index
    %c0_26 = arith.constant 0 : index
    %22 = vector.load %arg8[%c0_25, %c0_26] : memref<128x128xf32, #tpu.memory_space<vmem>>, vector<96x128xf32>
    %23 = vector.extract_strided_slice %1 {offsets = [32, 0], sizes = [96, 12], strides = [1, 1]} : vector<128x12xf32> to vector<96x12xf32>
    %c2 = arith.constant 2 : index
    %c0_27 = arith.constant 0 : index
    %c0_28 = arith.constant 0 : index
    %24 = vector.load %arg4[%c2, %c0_27, %c0_28] : memref<3x12x128xf32, #tpu.memory_space<vmem>>, vector<1x12x128xf32>
    %25 = vector.shape_cast %24 : vector<1x12x128xf32> to vector<12x128xf32>
    %cst_29 = arith.constant dense<0.000000e+00> : vector<96x128xf32>
    %26 = tpu.matmul %23, %25, %cst_29 {dimension_numbers = #tpu.dot_dimension_numbers<[1], [0], [0], [1], [0, 0, 1, 1], [], []>} : vector<96x12xf32>, vector<12x128xf32>, vector<96x128xf32> -> vector<96x128xf32>
    %27 = arith.addf %22, %26 : vector<96x128xf32>
    %c0_30 = arith.constant 0 : index
    %c0_31 = arith.constant 0 : index
    %28 = vector.load %arg8[%c0_30, %c0_31] : memref<128x128xf32, #tpu.memory_space<vmem>>, vector<96x128xf32>
    tpu.vector_store %arg8[%c0_30, %c0_31], %27 {strides = array<i32>} : memref<128x128xf32, #tpu.memory_space<vmem>>, vector<96x128xf32>,
    %c96 = arith.constant 96 : index
    %c0_32 = arith.constant 0 : index
    %29 = vector.load %arg8[%c96, %c0_32] : memref<128x128xf32, #tpu.memory_space<vmem>>, vector<32x128xf32>
    %c2_33 = arith.constant 2 : index
    %c0_34 = arith.constant 0 : index
    %c0_35 = arith.constant 0 : index
    %30 = vector.load %arg4[%c2_33, %c0_34, %c0_35] : memref<3x12x128xf32, #tpu.memory_space<vmem>>, vector<1x12x128xf32>
    %31 = vector.shape_cast %30 : vector<1x12x128xf32> to vector<12x128xf32>
    %cst_36 = arith.constant dense<0.000000e+00> : vector<32x128xf32>
    %32 = tpu.matmul %3, %31, %cst_36 {dimension_numbers = #tpu.dot_dimension_numbers<[1], [0], [0], [1], [0, 0, 1, 1], [], []>} : vector<32x12xf32>, vector<12x128xf32>, vector<32x128xf32> -> vector<32x128xf32>
    %33 = arith.addf %29, %32 : vector<32x128xf32>
    %c96_37 = arith.constant 96 : index
    %c0_38 = arith.constant 0 : index
    %34 = vector.load %arg8[%c96_37, %c0_38] : memref<128x128xf32, #tpu.memory_space<vmem>>, vector<32x128xf32>
    tpu.vector_store %arg8[%c96_37, %c0_38], %33 {strides = array<i32>} : memref<128x128xf32, #tpu.memory_space<vmem>>, vector<32x128xf32>,
    %c0_39 = arith.constant 0 : index
    %c0_40 = arith.constant 0 : index
    %35 = vector.load %arg8[%c0_39, %c0_40] : memref<128x128xf32, #tpu.memory_space<vmem>>, vector<128x128xf32>
    %c0_41 = arith.constant 0 : index
    %c0_42 = arith.constant 0 : index
    %36 = vector.load %arg5[%c0_41, %c0_42] : memref<1x128xf32, #tpu.memory_space<vmem>>, vector<1x128xf32>
    %37 = vector.broadcast %36 : vector<1x128xf32> to vector<128x128xf32>
    %38 = arith.mulf %35, %37 : vector<128x128xf32>
    %c0_43 = arith.constant 0 : index
    %c0_44 = arith.constant 0 : index
    %39 = vector.load %arg6[%c0_43, %c0_44] : memref<1x128xf32, #tpu.memory_space<vmem>>, vector<1x128xf32>
    %40 = vector.broadcast %39 : vector<1x128xf32> to vector<128x128xf32>
    %41 = arith.addf %38, %40 : vector<128x128xf32>
    %42 = arith.negf %41 : vector<128x128xf32>
    %43 = math.exp %42 : vector<128x128xf32>
    %cst_45 = arith.constant 1.000000e+00 : f32
    %44 = vector.broadcast %cst_45 : f32 to vector<128x128xf32>
    %45 = arith.addf %44, %43 : vector<128x128xf32>
    %46 = arith.divf %44, %45 : vector<128x128xf32>
    %47 = arith.mulf %41, %46 : vector<128x128xf32>
    %48 = vector.shape_cast %47 : vector<128x128xf32> to vector<1x128x128xf32>
    %c0_46 = arith.constant 0 : index
    %c0_47 = arith.constant 0 : index
    %c0_48 = arith.constant 0 : index
    %49 = vector.load %arg7[%c0_46, %c0_47, %c0_48] : memref<1x128x128xf32, #tpu.memory_space<vmem>>, vector<1x128x128xf32>
    tpu.vector_store %arg7[%c0_46, %c0_47, %c0_48], %48 {strides = array<i32>} : memref<1x128x128xf32, #tpu.memory_space<vmem>>, vector<1x128x128xf32>,
    return
  }
  func.func @transform_0(%arg0: i32, %arg1: i32) -> (i32, i32, i32) {
    %c0_i32 = arith.constant 0 : i32
    %c0_i32_0 = arith.constant 0 : i32
    return %arg0, %arg1, %c0_i32 : i32, i32, i32
  }
  func.func @transform_1(%arg0: i32, %arg1: i32) -> (i32, i32, i32, i32) {
    %c0_i32 = arith.constant 0 : i32
    %c0_i32_0 = arith.constant 0 : i32
    %c0_i32_1 = arith.constant 0 : i32
    return %arg0, %arg1, %c0_i32, %c0_i32_0 : i32, i32, i32, i32
  }
  func.func @transform_2(%arg0: i32, %arg1: i32) -> (i32, i32, i32) {
    %c0_i32 = arith.constant 0 : i32
    %c0_i32_0 = arith.constant 0 : i32
    %c0_i32_1 = arith.constant 0 : i32
    %c0_i32_2 = arith.constant 0 : i32
    return %c0_i32, %c0_i32_0, %c0_i32_1 : i32, i32, i32
  }
  func.func @transform_3(%arg0: i32, %arg1: i32) -> (i32, i32) {
    %c0_i32 = arith.constant 0 : i32
    %c0_i32_0 = arith.constant 0 : i32
    %c0_i32_1 = arith.constant 0 : i32
    return %c0_i32, %c0_i32_0 : i32, i32
  }
  func.func @transform_4(%arg0: i32, %arg1: i32) -> (i32, i32) {
    %c0_i32 = arith.constant 0 : i32
    %c0_i32_0 = arith.constant 0 : i32
    %c0_i32_1 = arith.constant 0 : i32
    return %c0_i32, %c0_i32_0 : i32, i32
  }
  func.func @transform_5(%arg0: i32, %arg1: i32) -> (i32, i32, i32) {
    %c0_i32 = arith.constant 0 : i32
    %c0_i32_0 = arith.constant 0 : i32
    return %arg0, %arg1, %c0_i32 : i32, i32, i32
  }
}

</mosaic_0001>

<llo_original>
// kernel: _lambda_.1
$region0: #{_lambda_.1}
  #allocation0 [shape = 'u32[]', space=smem, size = 0x4, offset = 0x4, fixed_abs, tag = 'smem constant byte address 0x4 - core index']
  #allocation1 [shape = 'u32[72,128]{1,0:T(1,128)}', space=vmem, size = 0x9000, scoped, tag = 'internal scratch']
  #allocation2 [shape = 'f32[128,128]{1,0:T(8,128)}', space=vmem, size = 0x10000, scoped, tag = 'scratch operand']
  %s0 = inlined_call_operand.vmem [shape: f32[2,256,12], index: 0, kind: input, shape index: {}]
  %s1 = inlined_call_operand.vmem [shape: f32[2,2,32,12], index: 1, kind: input, shape index: {}]
  %s2 = inlined_call_operand.vmem [shape: f32[3,12,128], index: 2, kind: input, shape index: {}]
  %s3 = inlined_call_operand.vmem [shape: f32[1,128], index: 3, kind: input, shape index: {}]
  %s4 = inlined_call_operand.vmem [shape: f32[1,128], index: 4, kind: input, shape index: {}]
  %s5 = inlined_call_operand.vmem [shape: f32[2,256,128], index: 5, kind: output, shape index: {}]
  %s6 = sld [smem:[#allocation0]]
  $region53: #{_lambda_.1} parent=0
    _
  %s8 = ssub.s32 1, %s6
  %s9 = scalar_select 0, %s8, %s6
  loop: start=0, step=1, limit=6
  $region2: #{_lambda_.1} parent=0 // loop_pre_header
    _
  $region3: #{_lambda_.1} parent=0 // loop_header
    %s11 = sphi 0, %s15
    %p12 = scmp.ge.s32.totalorder %s11, 6
    %s18 = sphi 0, %s30
    %s19 = sphi 0, %s26
    %s20 = sphi 0, %s18
    %s21 = sphi 0, %s19
    %s22 = sphi 0, %s20
    %s23 = sphi 0, %s21
    %s35 = sphi 0, %s37
    %s38 = sphi 0, %s35
    %s39 = sphi 0, %s38
    %s55 = sphi 0, %s39
    %s63 = sphi 0, %s65
    %s66 = sphi 0, %s63
    %s67 = sphi 0, %s66
    %s83 = sphi 0, %s67
    %s87 = sphi 0, %s87
    %s89 = sphi 0, %s87
    %s90 = sphi 0, %s89
    %s104 = sphi 0, %s90
    %s108 = sphi 0, %s108
    %s110 = sphi 0, %s108
    %s111 = sphi 0, %s110
    %s125 = sphi 0, %s111
    %s129 = sphi 0, %s129
    %s131 = sphi 0, %s129
    %s132 = sphi 0, %s131
    %s146 = sphi 0, %s132
    %s154 = sphi 0, %s156
    %s157 = sphi 0, %s154
    %s158 = sphi 0, %s157
    %s174 = sphi 0, %s158
  $region4: #{_lambda_.1} parent=0 // loop_header_branch
    %14 = sbr.rel (%p12) target = $region8
  $region5: #{_lambda_.1} parent=0 // loop_body
    %s16 = ssub.s32 %s11, 1
    %s17 = ssub.s32 %s11, 2
    %s24 = sadd.s32 1, %s19
    %p25 = scmp.ge.s32.totalorder %s24, 2
    %s26 = scalar_select %p25, 0, %s24
    %s27 = sadd.s32 1, %s18
    %s28 = scalar_select %p25, %s27, %s18
    %p29 = scmp.ge.s32.totalorder %s28, 2
    %s30 = scalar_select %p29, 0, %s28
    %s31 = ssub.s32 %s18, %s30
    %s32 = ssub.s32 %s19, %s26
    %s33 = sor.u32 %s31, %s32
    %p34 = scmp.eq.s32.totalorder %s33, 0
    %s36 = sadd.s32 %s35, 1
    %s37 = scalar_select %p34, %s35, %s36
    %p40 = pneg %p34
    %p41 = scmp.eq.s32.totalorder %s11, 3
    %p42 = por %p40, %p41
    %p43 = scmp.ne.s32.totalorder %s35, %s38
    %p44 = scmp.eq.s32.totalorder %s11, 0
    %p45 = por %p43, %p44
    %p46 = scmp.ne.s32.totalorder %s35, %s38
    %p47 = scmp.eq.s32.totalorder %s16, 3
    %p48 = por %p46, %p47
    %p49 = scmp.ne.s32.totalorder %s38, %s39
    %p50 = scmp.eq.s32.totalorder %s16, 0
    %p51 = por %p49, %p50
    %p52 = scmp.ne.s32.totalorder %s38, %s39
    %p53 = scmp.eq.s32.totalorder %s17, 3
    %p54 = por %p52, %p53
    %p56 = scmp.ne.s32.totalorder %s39, %s55
    %p57 = scmp.eq.s32.totalorder %s17, 0
    %p58 = por %p56, %p57
    %s59 = ssub.s32 %s18, %s30
    %s60 = ssub.s32 %s19, %s26
    %s61 = sor.u32 %s59, %s60
    %p62 = scmp.eq.s32.totalorder %s61, 0
    %s64 = sadd.s32 %s63, 1
    %s65 = scalar_select %p62, %s63, %s64
    %p68 = pneg %p62
    %p69 = scmp.eq.s32.totalorder %s11, 3
    %p70 = por %p68, %p69
    %p71 = scmp.ne.s32.totalorder %s63, %s66
    %p72 = scmp.eq.s32.totalorder %s11, 0
    %p73 = por %p71, %p72
    %p74 = scmp.ne.s32.totalorder %s63, %s66
    %p75 = scmp.eq.s32.totalorder %s16, 3
    %p76 = por %p74, %p75
    %p77 = scmp.ne.s32.totalorder %s66, %s67
    %p78 = scmp.eq.s32.totalorder %s16, 0
    %p79 = por %p77, %p78
    %p80 = scmp.ne.s32.totalorder %s66, %s67
    %p81 = scmp.eq.s32.totalorder %s17, 3
    %p82 = por %p80, %p81
    %p84 = scmp.ne.s32.totalorder %s67, %s83
    %p85 = scmp.eq.s32.totalorder %s17, 0
    %p86 = por %p84, %p85
    %s88 = sadd.s32 %s87, 1
    %p91 = scmp.eq.s32.totalorder %s11, 3
    %p92 = scmp.ne.s32.totalorder %s87, %s89
    %p93 = scmp.eq.s32.totalorder %s11, 0
    %p94 = por %p92, %p93
    %p95 = scmp.ne.s32.totalorder %s87, %s89
    %p96 = scmp.eq.s32.totalorder %s16, 3
    %p97 = por %p95, %p96
    %p98 = scmp.ne.s32.totalorder %s89, %s90
    %p99 = scmp.eq.s32.totalorder %s16, 0
    %p100 = por %p98, %p99
    %p101 = scmp.ne.s32.totalorder %s89, %s90
    %p102 = scmp.eq.s32.totalorder %s17, 3
    %p103 = por %p101, %p102
    %p105 = scmp.ne.s32.totalorder %s90, %s104
    %p106 = scmp.eq.s32.totalorder %s17, 0
    %p107 = por %p105, %p106
    %s109 = sadd.s32 %s108, 1
    %p112 = scmp.eq.s32.totalorder %s11, 3
    %p113 = scmp.ne.s32.totalorder %s108, %s110
    %p114 = scmp.eq.s32.totalorder %s11, 0
    %p115 = por %p113, %p114
    %p116 = scmp.ne.s32.totalorder %s108, %s110
    %p117 = scmp.eq.s32.totalorder %s16, 3
    %p118 = por %p116, %p117
    %p119 = scmp.ne.s32.totalorder %s110, %s111
    %p120 = scmp.eq.s32.totalorder %s16, 0
    %p121 = por %p119, %p120
    %p122 = scmp.ne.s32.totalorder %s110, %s111
    %p123 = scmp.eq.s32.totalorder %s17, 3
    %p124 = por %p122, %p123
    %p126 = scmp.ne.s32.totalorder %s111, %s125
    %p127 = scmp.eq.s32.totalorder %s17, 0
    %p128 = por %p126, %p127
    %s130 = sadd.s32 %s129, 1
    %p133 = scmp.eq.s32.totalorder %s11, 3
    %p134 = scmp.ne.s32.totalorder %s129, %s131
    %p135 = scmp.eq.s32.totalorder %s11, 0
    %p136 = por %p134, %p135
    %p137 = scmp.ne.s32.totalorder %s129, %s131
    %p138 = scmp.eq.s32.totalorder %s16, 3
    %p139 = por %p137, %p138
    %p140 = scmp.ne.s32.totalorder %s131, %s132
    %p141 = scmp.eq.s32.totalorder %s16, 0
    %p142 = por %p140, %p141
    %p143 = scmp.ne.s32.totalorder %s131, %s132
    %p144 = scmp.eq.s32.totalorder %s17, 3
    %p145 = por %p143, %p144
    %p147 = scmp.ne.s32.totalorder %s132, %s146
    %p148 = scmp.eq.s32.totalorder %s17, 0
    %p149 = por %p147, %p148
    %s150 = ssub.s32 %s18, %s30
    %s151 = ssub.s32 %s19, %s26
    %s152 = sor.u32 %s150, %s151
    %p153 = scmp.eq.s32.totalorder %s152, 0
    %s155 = sadd.s32 %s154, 1
    %s156 = scalar_select %p153, %s154, %s155
    %p159 = pneg %p153
    %p160 = scmp.eq.s32.totalorder %s11, 3
    %p161 = por %p159, %p160
    %p162 = scmp.ne.s32.totalorder %s154, %s157
    %p163 = scmp.eq.s32.totalorder %s11, 0
    %p164 = por %p162, %p163
    %p165 = scmp.ne.s32.totalorder %s154, %s157
    %p166 = scmp.eq.s32.totalorder %s16, 3
    %p167 = por %p165, %p166
    %p168 = scmp.ne.s32.totalorder %s157, %s158
    %p169 = scmp.eq.s32.totalorder %s16, 0
    %p170 = por %p168, %p169
    %p171 = scmp.ne.s32.totalorder %s157, %s158
    %p172 = scmp.eq.s32.totalorder %s17, 3
    %p173 = por %p171, %p172
    %p175 = scmp.ne.s32.totalorder %s158, %s174
    %p176 = scmp.eq.s32.totalorder %s17, 0
    %p177 = por %p175, %p176
    %p178 = scmp.le.s32.totalorder 1, %s11
    %p179 = scmp.lt.s32.totalorder %s11, 5
    %p180 = pnand %p178, %p179
    %p181 = pneg %p180
    // Predicated region
    $region9: #{_lambda_.1} parent=5 // pred_check
      _
    $region10: #{_lambda_.1} parent=5 // pred_check_branch
      %183 = sbr.rel (%p180) target = $region12
    $region11: #{_lambda_.1} parent=5 // pred_region
      %s184 = ssub.s32 %s11, 1
      // Predicated region
      $region13: #{_lambda_.1} parent=11 // pred_check
        %p185 = pneg %p100
      $region14: #{_lambda_.1} parent=11 // pred_check_branch
        %187 = sbr.rel (%p185) target = $region16
      $region15: #{_lambda_.1} parent=11 // pred_region
        _
      $region16: #{_lambda_.1} parent=11 // pred_fallthru
        _
      // Predicated region
      $region17: #{_lambda_.1} parent=11 // pred_check
        %p188 = pneg %p121
      $region18: #{_lambda_.1} parent=11 // pred_check_branch
        %190 = sbr.rel (%p188) target = $region20
      $region19: #{_lambda_.1} parent=11 // pred_region
        _
      $region20: #{_lambda_.1} parent=11 // pred_fallthru
        _
      // Predicated region
      $region21: #{_lambda_.1} parent=11 // pred_check
        %p191 = pneg %p142
      $region22: #{_lambda_.1} parent=11 // pred_check_branch
        %193 = sbr.rel (%p191) target = $region24
      $region23: #{_lambda_.1} parent=11 // pred_region
        _
      $region24: #{_lambda_.1} parent=11 // pred_fallthru
        _
    $region12: #{_lambda_.1} parent=5 // pred_fallthru
      _
    %p194 = scmp.lt.s32.totalorder %s11, 4
    // Predicated region
    $region25: #{_lambda_.1} parent=5 // pred_check
      %p195 = pneg %p194
    $region26: #{_lambda_.1} parent=5 // pred_check_branch
      %197 = sbr.rel (%p195) target = $region28
    $region27: #{_lambda_.1} parent=5 // pred_region
      // Predicated region
      $region29: #{_lambda_.1} parent=27 // pred_check
        %p198 = pneg %p45
      $region30: #{_lambda_.1} parent=27 // pred_check_branch
        %200 = sbr.rel (%p198) target = $region32
      $region31: #{_lambda_.1} parent=27 // pred_region
        %s201 = smul.u32 16, %s19
        %p202 = scmp.lt.s32.totalorder %s18, 1
        %s203 = scalar_select %p202, %s18, 1
        %p204 = scmp.lt.s32.totalorder %s201, 31
        %s205 = scalar_select %p204, %s201, 31
        %s206 = smul.addr %s203, 32
        %s207 = sadd.s32 %s205, %s206
        %s208 = smul.addr %s207, 8
        %s209 = scalar_lea.vmem %s0, %s208
        %s210 = smul.u32 16, %s19
      $region32: #{_lambda_.1} parent=27 // pred_fallthru
        _
      // Predicated region
      $region33: #{_lambda_.1} parent=27 // pred_check
        %p211 = pneg %p73
      $region34: #{_lambda_.1} parent=27 // pred_check_branch
        %213 = sbr.rel (%p211) target = $region36
      $region35: #{_lambda_.1} parent=27 // pred_region
        %p214 = scmp.lt.s32.totalorder %s18, 1
        %s215 = scalar_select %p214, %s18, 1
        %p216 = scmp.lt.s32.totalorder %s19, 1
        %s217 = scalar_select %p216, %s19, 1
        %s218 = smul.addr %s217, 4
        %s219 = smul.addr %s215, 8
        %s220 = sadd.s32 %s218, %s219
        %s221 = smul.addr %s220, 8
        %s222 = scalar_lea.vmem %s1, %s221
      $region36: #{_lambda_.1} parent=27 // pred_fallthru
        _
    $region28: #{_lambda_.1} parent=5 // pred_fallthru
      _
    %p223 = scmp.le.s32.totalorder 1, %s11
    %p224 = scmp.lt.s32.totalorder %s11, 5
    %p225 = pnand %p223, %p224
    %p226 = pneg %p225
    // Predicated region
    $region37: #{_lambda_.1} parent=5 // pred_check
      _
    $region38: #{_lambda_.1} parent=5 // pred_check_branch
      %228 = sbr.rel (%p225) target = $region40
    $region39: #{_lambda_.1} parent=5 // pred_region
      %s229 = ssub.s32 %s11, 1
      %s230 = smul.u32 16, %s21
      %p231 = scmp.lt.s32.totalorder %s20, 1
      %s232 = scalar_select %p231, %s20, 1
      %p233 = scmp.lt.s32.totalorder %s230, 31
      %s234 = scalar_select %p233, %s230, 31
      %s235 = smul.addr %s232, 32
      %s236 = sadd.s32 %s234, %s235
      %s237 = smul.addr %s236, 8
      %s238 = scalar_lea.vmem %s0, %s237
      %p239 = pneg %p51
      %p240 = pneg %p48
      %p241 = scmp.lt.s32.totalorder %s20, 1
      %s242 = scalar_select %p241, %s20, 1
      %p243 = scmp.lt.s32.totalorder %s21, 1
      %s244 = scalar_select %p243, %s21, 1
      %s245 = smul.addr %s244, 4
      %s246 = smul.addr %s242, 8
      %s247 = sadd.s32 %s245, %s246
      %s248 = smul.addr %s247, 8
      %s249 = scalar_lea.vmem %s1, %s248
      %p250 = pneg %p79
      %p251 = pneg %p76
      %p252 = pneg %p100
      %p253 = pneg %p97
      %p254 = pneg %p121
      %p255 = pneg %p118
      %p256 = pneg %p142
      %p257 = pneg %p139
      %p258 = pneg %p170
      %p259 = pneg %p167
      %s260 = smul.u32 16, %s21
      %p261 = scmp.lt.s32.totalorder %s20, 1
      %s262 = scalar_select %p261, %s20, 1
      %p263 = scmp.lt.s32.totalorder %s260, 31
      %s264 = scalar_select %p263, %s260, 31
      %s265 = smul.addr %s262, 32
      %s266 = sadd.s32 %s264, %s265
      %s267 = smul.addr %s266, 8
      %s268 = scalar_lea.vmem %s5, %s267
      %s269 = smul.u32 16, %s21
      %p270 = scmp.lt.s32.totalorder %s20, 1
      %s271 = scalar_select %p270, %s20, 1
      %p272 = scmp.lt.s32.totalorder %s269, 31
      %s273 = scalar_select %p272, %s269, 31
      %s274 = smul.addr %s271, 32
      %s275 = sadd.s32 %s273, %s274
      %s276 = smul.addr %s275, 8
      %s277 = scalar_lea.vmem %s0, %s276
      %s278 = smul.u32 16, %s21
      %p279 = scmp.lt.s32.totalorder %s20, 1
      %s280 = scalar_select %p279, %s20, 1
      %p281 = scmp.lt.s32.totalorder %s21, 1
      %s282 = scalar_select %p281, %s21, 1
      %s283 = smul.addr %s282, 4
      %s284 = smul.addr %s280, 8
      %s285 = sadd.s32 %s283, %s284
      %s286 = smul.addr %s285, 8
      %s287 = scalar_lea.vmem %s1, %s286
      %s288 = smul.u32 16, %s21
      %p289 = scmp.lt.s32.totalorder %s20, 1
      %s290 = scalar_select %p289, %s20, 1
      %p291 = scmp.lt.s32.totalorder %s288, 31
      %s292 = scalar_select %p291, %s288, 31
      %s293 = smul.addr %s290, 32
      %s294 = sadd.s32 %s292, %s293
      %s295 = smul.addr %s294, 8
      %s296 = scalar_lea.vmem %s5, %s295
      %s297 = smul.u32 16, %s21
      %v298 = vld [vmem:[%s277] sm:$0xff]
      %v299 = vld [vmem:[%s277 + $0x8] sm:$0xff]
      %v300 = vld [vmem:[%s277 + $0x10] sm:$0xff]
      %v301 = vld [vmem:[%s277 + $0x18] sm:$0xff]
      %v302 = vld [vmem:[%s277 + $0x20] sm:$0xff]
      %v303 = vld [vmem:[%s277 + $0x28] sm:$0xff]
      %v304 = vld [vmem:[%s277 + $0x30] sm:$0xff]
      %v305 = vld [vmem:[%s277 + $0x38] sm:$0xff]
      %v306 = vld [vmem:[%s277 + $0x40] sm:$0xff]
      %v307 = vld [vmem:[%s277 + $0x48] sm:$0xff]
      %v308 = vld [vmem:[%s277 + $0x50] sm:$0xff]
      %v309 = vld [vmem:[%s277 + $0x58] sm:$0xff]
      %v310 = vld [vmem:[%s277 + $0x60] sm:$0xff]
      %v311 = vld [vmem:[%s277 + $0x68] sm:$0xff]
      %v312 = vld [vmem:[%s277 + $0x70] sm:$0xff]
      %v313 = vld [vmem:[%s277 + $0x78] sm:$0xff]
      %v314 = vld [vmem:[%s287] sm:$0xff]
      %v315 = vld [vmem:[%s287 + $0x8] sm:$0xff]
      %v316 = vld [vmem:[%s287 + $0x10] sm:$0xff]
      %v317 = vld [vmem:[%s287 + $0x18] sm:$0xff]
      %v318 = vld [vmem:[%s2] sm:$0xff]
      %v319 = vld [vmem:[%s2 + $0x8] sm:$0xf]
      %vm320 = vcmask 97280
      %v322 = vsel %vm320, %v298, 0
      %v325 = vsel %vm320, %v299, 0
      %v328 = vsel %vm320, %v300, 0
      %v331 = vsel %vm320, %v301, 0
      %v334 = vsel %vm320, %v302, 0
      %v337 = vsel %vm320, %v303, 0
      %v340 = vsel %vm320, %v304, 0
      %v343 = vsel %vm320, %v305, 0
      %v346 = vsel %vm320, %v306, 0
      %v349 = vsel %vm320, %v307, 0
      %v352 = vsel %vm320, %v308, 0
      %v355 = vsel %vm320, %v309, 0
      %v358 = vsel %vm320, %v310, 0
      %v361 = vsel %vm320, %v311, 0
      %v364 = vsel %vm320, %v312, 0
      %v367 = vsel %vm320, %v313, 0
      %vm369 = vcmask 1043456
      %v371 = vsel %vm369, %v319, 0
      %373 = vmatpush.msra.mxu0 0.0
      %374 = vmatpush.msra.mxu0 0.0
      %375 = vmatpush.msra.mxu0 0.0
      %376 = vmatpush.msra.mxu0 0.0
      %377 = vmatpush.msra.mxu0 0.0
      %378 = vmatpush.msra.mxu0 0.0
      %379 = vmatpush.msra.mxu0 0.0
      %380 = vmatpush.msra.mxu0 0.0
      %381 = vmatpush.msra.mxu0 0.0
      %382 = vmatpush.msra.mxu0 0.0
      %383 = vmatpush.msra.mxu0 0.0
      %384 = vmatpush.msra.mxu0 0.0
      %385 = vmatpush.msra.mxu0 0.0
      %386 = vmatpush.msra.mxu0 0.0
      %387 = vmatpush.msra.mxu0 %v371
      %388 = vmatpush.msra.mxu0 %v318
      %389 = vmatmul.f32.gmra.mxu0 %v322
      %v390 = vpop.f32.mrf.mxu0
      %v391 = vadd.f32 0.0, %v390
      %392 = vmatmul.f32.gmra.mxu0 %v325
      %v393 = vpop.f32.mrf.mxu0
      %v394 = vadd.f32 0.0, %v393
      %395 = vmatmul.f32.gmra.mxu0 %v328
      %v396 = vpop.f32.mrf.mxu0
      %v397 = vadd.f32 0.0, %v396
      %398 = vmatmul.f32.gmra.mxu0 %v331
      %v399 = vpop.f32.mrf.mxu0
      %v400 = vadd.f32 0.0, %v399
      %401 = vmatmul.f32.gmra.mxu0 %v334
      %v402 = vpop.f32.mrf.mxu0
      %v403 = vadd.f32 0.0, %v402
      %404 = vmatmul.f32.gmra.mxu0 %v337
      %v405 = vpop.f32.mrf.mxu0
      %v406 = vadd.f32 0.0, %v405
      %407 = vmatmul.f32.gmra.mxu0 %v340
      %v408 = vpop.f32.mrf.mxu0
      %v409 = vadd.f32 0.0, %v408
      %410 = vmatmul.f32.gmra.mxu0 %v343
      %v411 = vpop.f32.mrf.mxu0
      %v412 = vadd.f32 0.0, %v411
      %413 = vmatmul.f32.gmra.mxu0 %v346
      %v414 = vpop.f32.mrf.mxu0
      %v415 = vadd.f32 0.0, %v414
      %416 = vmatmul.f32.gmra.mxu0 %v349
      %v417 = vpop.f32.mrf.mxu0
      %v418 = vadd.f32 0.0, %v417
      %419 = vmatmul.f32.gmra.mxu0 %v352
      %v420 = vpop.f32.mrf.mxu0
      %v421 = vadd.f32 0.0, %v420
      %422 = vmatmul.f32.gmra.mxu0 %v355
      %v423 = vpop.f32.mrf.mxu0
      %v424 = vadd.f32 0.0, %v423
      %425 = vmatmul.f32.gmra.mxu0 %v358
      %v426 = vpop.f32.mrf.mxu0
      %v427 = vadd.f32 0.0, %v426
      %428 = vmatmul.f32.gmra.mxu0 %v361
      %v429 = vpop.f32.mrf.mxu0
      %v430 = vadd.f32 0.0, %v429
      %431 = vmatmul.f32.gmra.mxu0 %v364
      %v432 = vpop.f32.mrf.mxu0
      %v433 = vadd.f32 0.0, %v432
      %434 = vmatmul.f32.gmra.mxu0 %v367
      %v435 = vpop.f32.mrf.mxu0
      %v436 = vadd.f32 0.0, %v435
      %437 = vdwg.mxu0
      %438 = vst [vmem:[#allocation2] sm:$0xff] %v391
      %439 = vst [vmem:[#allocation2 + $0x8] sm:$0xff] %v394
      %440 = vst [vmem:[#allocation2 + $0x10] sm:$0xff] %v397
      %441 = vst [vmem:[#allocation2 + $0x18] sm:$0xff] %v400
      %442 = vst [vmem:[#allocation2 + $0x20] sm:$0xff] %v403
      %443 = vst [vmem:[#allocation2 + $0x28] sm:$0xff] %v406
      %444 = vst [vmem:[#allocation2 + $0x30] sm:$0xff] %v409
      %445 = vst [vmem:[#allocation2 + $0x38] sm:$0xff] %v412
      %446 = vst [vmem:[#allocation2 + $0x40] sm:$0xff] %v415
      %447 = vst [vmem:[#allocation2 + $0x48] sm:$0xff] %v418
      %448 = vst [vmem:[#allocation2 + $0x50] sm:$0xff] %v421
      %449 = vst [vmem:[#allocation2 + $0x58] sm:$0xff] %v424
      %450 = vst [vmem:[#allocation2 + $0x60] sm:$0xff] %v427
      %451 = vst [vmem:[#allocation2 + $0x68] sm:$0xff] %v430
      %452 = vst [vmem:[#allocation2 + $0x70] sm:$0xff] %v433
      %453 = vst [vmem:[#allocation2 + $0x78] sm:$0xff] %v436
      %v454 = vld [vmem:[#allocation2] sm:$0xff]
      %v455 = vld [vmem:[#allocation2 + $0x8] sm:$0xff]
      %v456 = vld [vmem:[#allocation2 + $0x10] sm:$0xff]
      %v457 = vld [vmem:[#allocation2 + $0x18] sm:$0xff]
      %v458 = vld [vmem:[#allocation2 + $0x20] sm:$0xff]
      %v459 = vld [vmem:[#allocation2 + $0x28] sm:$0xff]
      %v460 = vld [vmem:[#allocation2 + $0x30] sm:$0xff]
      %v461 = vld [vmem:[#allocation2 + $0x38] sm:$0xff]
      %v462 = vld [vmem:[#allocation2 + $0x40] sm:$0xff]
      %v463 = vld [vmem:[#allocation2 + $0x48] sm:$0xff]
      %v464 = vld [vmem:[#allocation2 + $0x50] sm:$0xff]
      %v465 = vld [vmem:[#allocation2 + $0x58] sm:$0xff]
      %v466 = vld [vmem:[#allocation2 + $0x60] sm:$0xff]
      %v467 = vld [vmem:[#allocation2 + $0x68] sm:$0xff]
      %s468 = scalar_lea.vmem %s2, 16
      %v469 = vld [vmem:[%s468] sm:$0xff]
      %v470 = vld [vmem:[%s468 + $0x8] sm:$0xf]
      %v472 = vsel %vm369, %v470, 0
      %474 = vmatpush.msra.mxu0 0.0
      %475 = vmatpush.msra.mxu0 0.0
      %476 = vmatpush.msra.mxu0 0.0
      %477 = vmatpush.msra.mxu0 0.0
      %478 = vmatpush.msra.mxu0 0.0
      %479 = vmatpush.msra.mxu0 0.0
      %480 = vmatpush.msra.mxu0 0.0
      %481 = vmatpush.msra.mxu0 0.0
      %482 = vmatpush.msra.mxu0 0.0
      %483 = vmatpush.msra.mxu0 0.0
      %484 = vmatpush.msra.mxu0 0.0
      %485 = vmatpush.msra.mxu0 0.0
      %486 = vmatpush.msra.mxu0 0.0
      %487 = vmatpush.msra.mxu0 0.0
      %488 = vmatpush.msra.mxu0 %v472
      %489 = vmatpush.msra.mxu0 %v469
      %490 = vmatmul.f32.gmra.mxu0 %v328
      %v491 = vpop.f32.mrf.mxu0
      %v492 = vadd.f32 0.0, %v491
      %493 = vmatmul.f32.gmra.mxu0 %v331
      %v494 = vpop.f32.mrf.mxu0
      %v495 = vadd.f32 0.0, %v494
      %496 = vmatmul.f32.gmra.mxu0 %v334
      %v497 = vpop.f32.mrf.mxu0
      %v498 = vadd.f32 0.0, %v497
      %499 = vmatmul.f32.gmra.mxu0 %v337
      %v500 = vpop.f32.mrf.mxu0
      %v501 = vadd.f32 0.0, %v500
      %502 = vmatmul.f32.gmra.mxu0 %v340
      %v503 = vpop.f32.mrf.mxu0
      %v504 = vadd.f32 0.0, %v503
      %505 = vmatmul.f32.gmra.mxu0 %v343
      %v506 = vpop.f32.mrf.mxu0
      %v507 = vadd.f32 0.0, %v506
      %508 = vmatmul.f32.gmra.mxu0 %v346
      %v509 = vpop.f32.mrf.mxu0
      %v510 = vadd.f32 0.0, %v509
      %511 = vmatmul.f32.gmra.mxu0 %v349
      %v512 = vpop.f32.mrf.mxu0
      %v513 = vadd.f32 0.0, %v512
      %514 = vmatmul.f32.gmra.mxu0 %v352
      %v515 = vpop.f32.mrf.mxu0
      %v516 = vadd.f32 0.0, %v515
      %517 = vmatmul.f32.gmra.mxu0 %v355
      %v518 = vpop.f32.mrf.mxu0
      %v519 = vadd.f32 0.0, %v518
      %520 = vmatmul.f32.gmra.mxu0 %v358
      %v521 = vpop.f32.mrf.mxu0
      %v522 = vadd.f32 0.0, %v521
      %523 = vmatmul.f32.gmra.mxu0 %v361
      %v524 = vpop.f32.mrf.mxu0
      %v525 = vadd.f32 0.0, %v524
      %526 = vmatmul.f32.gmra.mxu0 %v364
      %v527 = vpop.f32.mrf.mxu0
      %v528 = vadd.f32 0.0, %v527
      %529 = vmatmul.f32.gmra.mxu0 %v367
      %v530 = vpop.f32.mrf.mxu0
      %v531 = vadd.f32 0.0, %v530
      %532 = vdwg.mxu0
      %v533 = vadd.f32 %v454, %v492
      %v534 = vadd.f32 %v455, %v495
      %v535 = vadd.f32 %v456, %v498
      %v536 = vadd.f32 %v457, %v501
      %v537 = vadd.f32 %v458, %v504
      %v538 = vadd.f32 %v459, %v507
      %v539 = vadd.f32 %v460, %v510
      %v540 = vadd.f32 %v461, %v513
      %v541 = vadd.f32 %v462, %v516
      %v542 = vadd.f32 %v463, %v519
      %v543 = vadd.f32 %v464, %v522
      %v544 = vadd.f32 %v465, %v525
      %v545 = vadd.f32 %v466, %v528
      %v546 = vadd.f32 %v467, %v531
      %547 = vst [vmem:[#allocation2] sm:$0xff] %v533
      %548 = vst [vmem:[#allocation2 + $0x8] sm:$0xff] %v534
      %549 = vst [vmem:[#allocation2 + $0x10] sm:$0xff] %v535
      %550 = vst [vmem:[#allocation2 + $0x18] sm:$0xff] %v536
      %551 = vst [vmem:[#allocation2 + $0x20] sm:$0xff] %v537
      %552 = vst [vmem:[#allocation2 + $0x28] sm:$0xff] %v538
      %553 = vst [vmem:[#allocation2 + $0x30] sm:$0xff] %v539
      %554 = vst [vmem:[#allocation2 + $0x38] sm:$0xff] %v540
      %555 = vst [vmem:[#allocation2 + $0x40] sm:$0xff] %v541
      %556 = vst [vmem:[#allocation2 + $0x48] sm:$0xff] %v542
      %557 = vst [vmem:[#allocation2 + $0x50] sm:$0xff] %v543
      %558 = vst [vmem:[#allocation2 + $0x58] sm:$0xff] %v544
      %559 = vst [vmem:[#allocation2 + $0x60] sm:$0xff] %v545
      %560 = vst [vmem:[#allocation2 + $0x68] sm:$0xff] %v546
      %v561 = vld [vmem:[#allocation2 + $0x70] sm:$0xff]
      %v562 = vld [vmem:[#allocation2 + $0x78] sm:$0xff]
      %v563 = vld [vmem:[%s468] sm:$0xff]
      %v564 = vld [vmem:[%s468 + $0x8] sm:$0xf]
      %v566 = vsel %vm320, %v314, 0
      %v569 = vsel %vm320, %v315, 0
      %v572 = vsel %vm369, %v564, 0
      %574 = vmatpush.msra.mxu0 0.0
      %575 = vmatpush.msra.mxu0 0.0
      %576 = vmatpush.msra.mxu0 0.0
      %577 = vmatpush.msra.mxu0 0.0
      %578 = vmatpush.msra.mxu0 0.0
      %579 = vmatpush.msra.mxu0 0.0
      %580 = vmatpush.msra.mxu0 0.0
      %581 = vmatpush.msra.mxu0 0.0
      %582 = vmatpush.msra.mxu0 0.0
      %583 = vmatpush.msra.mxu0 0.0
      %584 = vmatpush.msra.mxu0 0.0
      %585 = vmatpush.msra.mxu0 0.0
      %586 = vmatpush.msra.mxu0 0.0
      %587 = vmatpush.msra.mxu0 0.0
      %588 = vmatpush.msra.mxu0 %v572
      %589 = vmatpush.msra.mxu0 %v563
      %590 = vmatmul.f32.gmra.mxu0 %v566
      %v591 = vpop.f32.mrf.mxu0
      %v592 = vadd.f32 0.0, %v591
      %593 = vmatmul.f32.gmra.mxu0 %v569
      %v594 = vpop.f32.mrf.mxu0
      %v595 = vadd.f32 0.0, %v594
      %596 = vdwg.mxu0
      %v597 = vadd.f32 %v561, %v592
      %v598 = vadd.f32 %v562, %v595
      %599 = vst [vmem:[#allocation2 + $0x70] sm:$0xff] %v597
      %600 = vst [vmem:[#allocation2 + $0x78] sm:$0xff] %v598
      %v601 = vld [vmem:[#allocation2] sm:$0xff]
      %v602 = vld [vmem:[#allocation2 + $0x8] sm:$0xff]
      %v603 = vld [vmem:[#allocation2 + $0x10] sm:$0xff]
      %v604 = vld [vmem:[#allocation2 + $0x18] sm:$0xff]
      %v605 = vld [vmem:[#allocation2 + $0x20] sm:$0xff]
      %v606 = vld [vmem:[#allocation2 + $0x28] sm:$0xff]
      %v607 = vld [vmem:[#allocation2 + $0x30] sm:$0xff]
      %v608 = vld [vmem:[#allocation2 + $0x38] sm:$0xff]
      %v609 = vld [vmem:[#allocation2 + $0x40] sm:$0xff]
      %v610 = vld [vmem:[#allocation2 + $0x48] sm:$0xff]
      %v611 = vld [vmem:[#allocation2 + $0x50] sm:$0xff]
      %v612 = vld [vmem:[#allocation2 + $0x58] sm:$0xff]
      %s613 = scalar_lea.vmem %s2, 32
      %v614 = vld [vmem:[%s613] sm:$0xff]
      %v615 = vld [vmem:[%s613 + $0x8] sm:$0xf]
      %v617 = vsel %vm369, %v615, 0
      %619 = vmatpush.msra.mxu0 0.0
      %620 = vmatpush.msra.mxu0 0.0
      %621 = vmatpush.msra.mxu0 0.0
      %622 = vmatpush.msra.mxu0 0.0
      %623 = vmatpush.msra.mxu0 0.0
      %624 = vmatpush.msra.mxu0 0.0
      %625 = vmatpush.msra.mxu0 0.0
      %626 = vmatpush.msra.mxu0 0.0
      %627 = vmatpush.msra.mxu0 0.0
      %628 = vmatpush.msra.mxu0 0.0
      %629 = vmatpush.msra.mxu0 0.0
      %630 = vmatpush.msra.mxu0 0.0
      %631 = vmatpush.msra.mxu0 0.0
      %632 = vmatpush.msra.mxu0 0.0
      %633 = vmatpush.msra.mxu0 %v617
      %634 = vmatpush.msra.mxu0 %v614
      %635 = vmatmul.f32.gmra.mxu0 %v334
      %v636 = vpop.f32.mrf.mxu0
      %v637 = vadd.f32 0.0, %v636
      %638 = vmatmul.f32.gmra.mxu0 %v337
      %v639 = vpop.f32.mrf.mxu0
      %v640 = vadd.f32 0.0, %v639
      %641 = vmatmul.f32.gmra.mxu0 %v340
      %v642 = vpop.f32.mrf.mxu0
      %v643 = vadd.f32 0.0, %v642
      %644 = vmatmul.f32.gmra.mxu0 %v343
      %v645 = vpop.f32.mrf.mxu0
      %v646 = vadd.f32 0.0, %v645
      %647 = vmatmul.f32.gmra.mxu0 %v346
      %v648 = vpop.f32.mrf.mxu0
      %v649 = vadd.f32 0.0, %v648
      %650 = vmatmul.f32.gmra.mxu0 %v349
      %v651 = vpop.f32.mrf.mxu0
      %v652 = vadd.f32 0.0, %v651
      %653 = vmatmul.f32.gmra.mxu0 %v352
      %v654 = vpop.f32.mrf.mxu0
      %v655 = vadd.f32 0.0, %v654
      %656 = vmatmul.f32.gmra.mxu0 %v355
      %v657 = vpop.f32.mrf.mxu0
      %v658 = vadd.f32 0.0, %v657
      %659 = vmatmul.f32.gmra.mxu0 %v358
      %v660 = vpop.f32.mrf.mxu0
      %v661 = vadd.f32 0.0, %v660
      %662 = vmatmul.f32.gmra.mxu0 %v361
      %v663 = vpop.f32.mrf.mxu0
      %v664 = vadd.f32 0.0, %v663
      %665 = vmatmul.f32.gmra.mxu0 %v364
      %v666 = vpop.f32.mrf.mxu0
      %v667 = vadd.f32 0.0, %v666
      %668 = vmatmul.f32.gmra.mxu0 %v367
      %v669 = vpop.f32.mrf.mxu0
      %v670 = vadd.f32 0.0, %v669
      %671 = vdwg.mxu0
      %v672 = vadd.f32 %v601, %v637
      %v673 = vadd.f32 %v602, %v640
      %v674 = vadd.f32 %v603, %v643
      %v675 = vadd.f32 %v604, %v646
      %v676 = vadd.f32 %v605, %v649
      %v677 = vadd.f32 %v606, %v652
      %v678 = vadd.f32 %v607, %v655
      %v679 = vadd.f32 %v608, %v658
      %v680 = vadd.f32 %v609, %v661
      %v681 = vadd.f32 %v610, %v664
      %v682 = vadd.f32 %v611, %v667
      %v683 = vadd.f32 %v612, %v670
      %684 = vst [vmem:[#allocation2] sm:$0xff] %v672
      %685 = vst [vmem:[#allocation2 + $0x8] sm:$0xff] %v673
      %686 = vst [vmem:[#allocation2 + $0x10] sm:$0xff] %v674
      %687 = vst [vmem:[#allocation2 + $0x18] sm:$0xff] %v675
      %688 = vst [vmem:[#allocation2 + $0x20] sm:$0xff] %v676
      %689 = vst [vmem:[#allocation2 + $0x28] sm:$0xff] %v677
      %690 = vst [vmem:[#allocation2 + $0x30] sm:$0xff] %v678
      %691 = vst [vmem:[#allocation2 + $0x38] sm:$0xff] %v679
      %692 = vst [vmem:[#allocation2 + $0x40] sm:$0xff] %v680
      %693 = vst [vmem:[#allocation2 + $0x48] sm:$0xff] %v681
      %694 = vst [vmem:[#allocation2 + $0x50] sm:$0xff] %v682
      %695 = vst [vmem:[#allocation2 + $0x58] sm:$0xff] %v683
      %v696 = vld [vmem:[#allocation2 + $0x60] sm:$0xff]
      %v697 = vld [vmem:[#allocation2 + $0x68] sm:$0xff]
      %v698 = vld [vmem:[#allocation2 + $0x70] sm:$0xff]
      %v699 = vld [vmem:[#allocation2 + $0x78] sm:$0xff]
      %v700 = vld [vmem:[%s613] sm:$0xff]
      %v701 = vld [vmem:[%s613 + $0x8] sm:$0xf]
      %v703 = vsel %vm320, %v316, 0
      %v706 = vsel %vm320, %v317, 0
      %v709 = vsel %vm369, %v701, 0
      %711 = vmatpush.msra.mxu0 0.0
      %712 = vmatpush.msra.mxu0 0.0
      %713 = vmatpush.msra.mxu0 0.0
      %714 = vmatpush.msra.mxu0 0.0
      %715 = vmatpush.msra.mxu0 0.0
      %716 = vmatpush.msra.mxu0 0.0
      %717 = vmatpush.msra.mxu0 0.0
      %718 = vmatpush.msra.mxu0 0.0
      %719 = vmatpush.msra.mxu0 0.0
      %720 = vmatpush.msra.mxu0 0.0
      %721 = vmatpush.msra.mxu0 0.0
      %722 = vmatpush.msra.mxu0 0.0
      %723 = vmatpush.msra.mxu0 0.0
      %724 = vmatpush.msra.mxu0 0.0
      %725 = vmatpush.msra.mxu0 %v709
      %726 = vmatpush.msra.mxu0 %v700
      %727 = vmatmul.f32.gmra.mxu0 %v566
      %v728 = vpop.f32.mrf.mxu0
      %v729 = vadd.f32 0.0, %v728
      %730 = vmatmul.f32.gmra.mxu0 %v569
      %v731 = vpop.f32.mrf.mxu0
      %v732 = vadd.f32 0.0, %v731
      %733 = vmatmul.f32.gmra.mxu0 %v703
      %v734 = vpop.f32.mrf.mxu0
      %v735 = vadd.f32 0.0, %v734
      %736 = vmatmul.f32.gmra.mxu0 %v706
      %v737 = vpop.f32.mrf.mxu0
      %v738 = vadd.f32 0.0, %v737
      %739 = vdwg.mxu0
      %v740 = vadd.f32 %v696, %v729
      %v741 = vadd.f32 %v697, %v732
      %v742 = vadd.f32 %v698, %v735
      %v743 = vadd.f32 %v699, %v738
      %744 = vst [vmem:[#allocation2 + $0x60] sm:$0xff] %v740
      %745 = vst [vmem:[#allocation2 + $0x68] sm:$0xff] %v741
      %746 = vst [vmem:[#allocation2 + $0x70] sm:$0xff] %v742
      %747 = vst [vmem:[#allocation2 + $0x78] sm:$0xff] %v743
      %v748 = vld [vmem:[#allocation2] sm:$0xff]
      %v749 = vld [vmem:[#allocation2 + $0x8] sm:$0xff]
      %v750 = vld [vmem:[#allocation2 + $0x10] sm:$0xff]
      %v751 = vld [vmem:[#allocation2 + $0x18] sm:$0xff]
      %v752 = vld [vmem:[#allocation2 + $0x20] sm:$0xff]
      %v753 = vld [vmem:[#allocation2 + $0x28] sm:$0xff]
      %v754 = vld [vmem:[#allocation2 + $0x30] sm:$0xff]
      %v755 = vld [vmem:[#allocation2 + $0x38] sm:$0xff]
      %v756 = vld [vmem:[#allocation2 + $0x40] sm:$0xff]
      %v757 = vld [vmem:[#allocation2 + $0x48] sm:$0xff]
      %v758 = vld [vmem:[#allocation2 + $0x50] sm:$0xff]
      %v759 = vld [vmem:[#allocation2 + $0x58] sm:$0xff]
      %v760 = vld [vmem:[#allocation2 + $0x60] sm:$0xff]
      %v761 = vld [vmem:[#allocation2 + $0x68] sm:$0xff]
      %v762 = vld [vmem:[#allocation2 + $0x70] sm:$0xff]
      %v763 = vld [vmem:[#allocation2 + $0x78] sm:$0xff]
      %v764 = vld [vmem:[%s3] sm:$0x1]
      %v766 = vperm.slane %v764, 0
      %v768 = vmul.f32 %v748, %v766
      %v769 = vmul.f32 %v749, %v766
      %v770 = vmul.f32 %v750, %v766
      %v771 = vmul.f32 %v751, %v766
      %v772 = vmul.f32 %v752, %v766
      %v773 = vmul.f32 %v753, %v766
      %v774 = vmul.f32 %v754, %v766
      %v775 = vmul.f32 %v755, %v766
      %v776 = vmul.f32 %v756, %v766
      %v777 = vmul.f32 %v757, %v766
      %v778 = vmul.f32 %v758, %v766
      %v779 = vmul.f32 %v759, %v766
      %v780 = vmul.f32 %v760, %v766
      %v781 = vmul.f32 %v761, %v766
      %v782 = vmul.f32 %v762, %v766
      %v783 = vmul.f32 %v763, %v766
      %v784 = vld [vmem:[%s4] sm:$0x1]
      %v786 = vperm.slane %v784, 0
      %v788 = vadd.f32 %v768, %v786
      %v789 = vadd.f32 %v769, %v786
      %v790 = vadd.f32 %v770, %v786
      %v791 = vadd.f32 %v771, %v786
      %v792 = vadd.f32 %v772, %v786
      %v793 = vadd.f32 %v773, %v786
      %v794 = vadd.f32 %v774, %v786
      %v795 = vadd.f32 %v775, %v786
      %v796 = vadd.f32 %v776, %v786
      %v797 = vadd.f32 %v777, %v786
      %v798 = vadd.f32 %v778, %v786
      %v799 = vadd.f32 %v779, %v786
      %v800 = vadd.f32 %v780, %v786
      %v801 = vadd.f32 %v781, %v786
      %v802 = vadd.f32 %v782, %v786
      %v803 = vadd.f32 %v783, %v786
      %v804 = vxor.u32 %v788, 2147483648
      %v805 = vxor.u32 %v789, 2147483648
      %v806 = vxor.u32 %v790, 2147483648
      %v807 = vxor.u32 %v791, 2147483648
      %v808 = vxor.u32 %v792, 2147483648
      %v809 = vxor.u32 %v793, 2147483648
      %v810 = vxor.u32 %v794, 2147483648
      %v811 = vxor.u32 %v795, 2147483648
      %v812 = vxor.u32 %v796, 2147483648
      %v813 = vxor.u32 %v797, 2147483648
      %v814 = vxor.u32 %v798, 2147483648
      %v815 = vxor.u32 %v799, 2147483648
      %v816 = vxor.u32 %v800, 2147483648
      %v817 = vxor.u32 %v801, 2147483648
      %v818 = vxor.u32 %v802, 2147483648
      %v819 = vxor.u32 %v803, 2147483648
      %v820 = vmul.f32 %v804, 1.442695
      %v821 = vpow.pop %v820
      %v822 = vmul.f32 %v805, 1.442695
      %v823 = vpow.pop %v822
      %v824 = vmul.f32 %v806, 1.442695
      %v825 = vpow.pop %v824
      %v826 = vmul.f32 %v807, 1.442695
      %v827 = vpow.pop %v826
      %v828 = vmul.f32 %v808, 1.442695
      %v829 = vpow.pop %v828
      %v830 = vmul.f32 %v809, 1.442695
      %v831 = vpow.pop %v830
      %v832 = vmul.f32 %v810, 1.442695
      %v833 = vpow.pop %v832
      %v834 = vmul.f32 %v811, 1.442695
      %v835 = vpow.pop %v834
      %v836 = vmul.f32 %v812, 1.442695
      %v837 = vpow.pop %v836
      %v838 = vmul.f32 %v813, 1.442695
      %v839 = vpow.pop %v838
      %v840 = vmul.f32 %v814, 1.442695
      %v841 = vpow.pop %v840
      %v842 = vmul.f32 %v815, 1.442695
      %v843 = vpow.pop %v842
      %v844 = vmul.f32 %v816, 1.442695
      %v845 = vpow.pop %v844
      %v846 = vmul.f32 %v817, 1.442695
      %v847 = vpow.pop %v846
      %v848 = vmul.f32 %v818, 1.442695
      %v849 = vpow.pop %v848
      %v850 = vmul.f32 %v819, 1.442695
      %v851 = vpow.pop %v850
      %v852 = vadd.f32 %v821, 1.0
      %v853 = vadd.f32 %v823, 1.0
      %v854 = vadd.f32 %v825, 1.0
      %v855 = vadd.f32 %v827, 1.0
      %v856 = vadd.f32 %v829, 1.0
      %v857 = vadd.f32 %v831, 1.0
      %v858 = vadd.f32 %v833, 1.0
      %v859 = vadd.f32 %v835, 1.0
      %v860 = vadd.f32 %v837, 1.0
      %v861 = vadd.f32 %v839, 1.0
      %v862 = vadd.f32 %v841, 1.0
      %v863 = vadd.f32 %v843, 1.0
      %v864 = vadd.f32 %v845, 1.0
      %v865 = vadd.f32 %v847, 1.0
      %v866 = vadd.f32 %v849, 1.0
      %v867 = vadd.f32 %v851, 1.0
      %v868 = vrcp.pop %v852
      %v869 = vmul.f32 %v852, %v868
      %v870 = vsub.f32 1.0, %v869
      %v871 = vmul.f32 %v868, %v870
      %v872 = vadd.f32 %v868, %v871
      %vm873 = vweird.f32 %v852
      %vm874 = vweird.f32 %v868
      %vm875 = vmor %vm873, %vm874
      %v876 = vsel %vm875, %v868, %v872
      %v877 = vand.u32 2147483647, %v852
      %vm878 = vcmp.eq.f32.partialorder %v877, 8.507059e+37
      %v879 = vand.u32 %v852, 2147483648
      %v880 = vor.u32 1.1754944e-38, %v879
      %v881 = vsel %vm878, %v880, %v876
      %v882 = vmul.f32 1.0, %v881
      %v883 = vrcp.pop %v853
      %v884 = vmul.f32 %v853, %v883
      %v885 = vsub.f32 1.0, %v884
      %v886 = vmul.f32 %v883, %v885
      %v887 = vadd.f32 %v883, %v886
      %vm888 = vweird.f32 %v853
      %vm889 = vweird.f32 %v883
      %vm890 = vmor %vm888, %vm889
      %v891 = vsel %vm890, %v883, %v887
      %v892 = vand.u32 2147483647, %v853
      %vm893 = vcmp.eq.f32.partialorder %v892, 8.507059e+37
      %v894 = vand.u32 %v853, 2147483648
      %v895 = vor.u32 1.1754944e-38, %v894
      %v896 = vsel %vm893, %v895, %v891
      %v897 = vmul.f32 1.0, %v896
      %v898 = vrcp.pop %v854
      %v899 = vmul.f32 %v854, %v898
      %v900 = vsub.f32 1.0, %v899
      %v901 = vmul.f32 %v898, %v900
      %v902 = vadd.f32 %v898, %v901
      %vm903 = vweird.f32 %v854
      %vm904 = vweird.f32 %v898
      %vm905 = vmor %vm903, %vm904
      %v906 = vsel %vm905, %v898, %v902
      %v907 = vand.u32 2147483647, %v854
      %vm908 = vcmp.eq.f32.partialorder %v907, 8.507059e+37
      %v909 = vand.u32 %v854, 2147483648
      %v910 = vor.u32 1.1754944e-38, %v909
      %v911 = vsel %vm908, %v910, %v906
      %v912 = vmul.f32 1.0, %v911
      %v913 = vrcp.pop %v855
      %v914 = vmul.f32 %v855, %v913
      %v915 = vsub.f32 1.0, %v914
      %v916 = vmul.f32 %v913, %v915
      %v917 = vadd.f32 %v913, %v916
      %vm918 = vweird.f32 %v855
      %vm919 = vweird.f32 %v913
      %vm920 = vmor %vm918, %vm919
      %v921 = vsel %vm920, %v913, %v917
      %v922 = vand.u32 2147483647, %v855
      %vm923 = vcmp.eq.f32.partialorder %v922, 8.507059e+37
      %v924 = vand.u32 %v855, 2147483648
      %v925 = vor.u32 1.1754944e-38, %v924
      %v926 = vsel %vm923, %v925, %v921
      %v927 = vmul.f32 1.0, %v926
      %v928 = vrcp.pop %v856
      %v929 = vmul.f32 %v856, %v928
      %v930 = vsub.f32 1.0, %v929
      %v931 = vmul.f32 %v928, %v930
      %v932 = vadd.f32 %v928, %v931
      %vm933 = vweird.f32 %v856
      %vm934 = vweird.f32 %v928
      %vm935 = vmor %vm933, %vm934
      %v936 = vsel %vm935, %v928, %v932
      %v937 = vand.u32 2147483647, %v856
      %vm938 = vcmp.eq.f32.partialorder %v937, 8.507059e+37
      %v939 = vand.u32 %v856, 2147483648
      %v940 = vor.u32 1.1754944e-38, %v939
      %v941 = vsel %vm938, %v940, %v936
      %v942 = vmul.f32 1.0, %v941
      %v943 = vrcp.pop %v857
      %v944 = vmul.f32 %v857, %v943
      %v945 = vsub.f32 1.0, %v944
      %v946 = vmul.f32 %v943, %v945
      %v947 = vadd.f32 %v943, %v946
      %vm948 = vweird.f32 %v857
      %vm949 = vweird.f32 %v943
      %vm950 = vmor %vm948, %vm949
      %v951 = vsel %vm950, %v943, %v947
      %v952 = vand.u32 2147483647, %v857
      %vm953 = vcmp.eq.f32.partialorder %v952, 8.507059e+37
      %v954 = vand.u32 %v857, 2147483648
      %v955 = vor.u32 1.1754944e-38, %v954
      %v956 = vsel %vm953, %v955, %v951
      %v957 = vmul.f32 1.0, %v956
      %v958 = vrcp.pop %v858
      %v959 = vmul.f32 %v858, %v958
      %v960 = vsub.f32 1.0, %v959
      %v961 = vmul.f32 %v958, %v960
      %v962 = vadd.f32 %v958, %v961
      %vm963 = vweird.f32 %v858
      %vm964 = vweird.f32 %v958
      %vm965 = vmor %vm963, %vm964
      %v966 = vsel %vm965, %v958, %v962
      %v967 = vand.u32 2147483647, %v858
      %vm968 = vcmp.eq.f32.partialorder %v967, 8.507059e+37
      %v969 = vand.u32 %v858, 2147483648
      %v970 = vor.u32 1.1754944e-38, %v969
      %v971 = vsel %vm968, %v970, %v966
      %v972 = vmul.f32 1.0, %v971
      %v973 = vrcp.pop %v859
      %v974 = vmul.f32 %v859, %v973
      %v975 = vsub.f32 1.0, %v974
      %v976 = vmul.f32 %v973, %v975
      %v977 = vadd.f32 %v973, %v976
      %vm978 = vweird.f32 %v859
      %vm979 = vweird.f32 %v973
      %vm980 = vmor %vm978, %vm979
      %v981 = vsel %vm980, %v973, %v977
      %v982 = vand.u32 2147483647, %v859
      %vm983 = vcmp.eq.f32.partialorder %v982, 8.507059e+37
      %v984 = vand.u32 %v859, 2147483648
      %v985 = vor.u32 1.1754944e-38, %v984
      %v986 = vsel %vm983, %v985, %v981
      %v987 = vmul.f32 1.0, %v986
      %v988 = vrcp.pop %v860
      %v989 = vmul.f32 %v860, %v988
      %v990 = vsub.f32 1.0, %v989
      %v991 = vmul.f32 %v988, %v990
      %v992 = vadd.f32 %v988, %v991
      %vm993 = vweird.f32 %v860
      %vm994 = vweird.f32 %v988
      %vm995 = vmor %vm993, %vm994
      %v996 = vsel %vm995, %v988, %v992
      %v997 = vand.u32 2147483647, %v860
      %vm998 = vcmp.eq.f32.partialorder %v997, 8.507059e+37
      %v999 = vand.u32 %v860, 2147483648
      %v1000 = vor.u32 1.1754944e-38, %v999
      %v1001 = vsel %vm998, %v1000, %v996
      %v1002 = vmul.f32 1.0, %v1001
      %v1003 = vrcp.pop %v861
      %v1004 = vmul.f32 %v861, %v1003
      %v1005 = vsub.f32 1.0, %v1004
      %v1006 = vmul.f32 %v1003, %v1005
      %v1007 = vadd.f32 %v1003, %v1006
      %vm1008 = vweird.f32 %v861
      %vm1009 = vweird.f32 %v1003
      %vm1010 = vmor %vm1008, %vm1009
      %v1011 = vsel %vm1010, %v1003, %v1007
      %v1012 = vand.u32 2147483647, %v861
      %vm1013 = vcmp.eq.f32.partialorder %v1012, 8.507059e+37
      %v1014 = vand.u32 %v861, 2147483648
      %v1015 = vor.u32 1.1754944e-38, %v1014
      %v1016 = vsel %vm1013, %v1015, %v1011
      %v1017 = vmul.f32 1.0, %v1016
      %v1018 = vrcp.pop %v862
      %v1019 = vmul.f32 %v862, %v1018
      %v1020 = vsub.f32 1.0, %v1019
      %v1021 = vmul.f32 %v1018, %v1020
      %v1022 = vadd.f32 %v1018, %v1021
      %vm1023 = vweird.f32 %v862
      %vm1024 = vweird.f32 %v1018
      %vm1025 = vmor %vm1023, %vm1024
      %v1026 = vsel %vm1025, %v1018, %v1022
      %v1027 = vand.u32 2147483647, %v862
      %vm1028 = vcmp.eq.f32.partialorder %v1027, 8.507059e+37
      %v1029 = vand.u32 %v862, 2147483648
      %v1030 = vor.u32 1.1754944e-38, %v1029
      %v1031 = vsel %vm1028, %v1030, %v1026
      %v1032 = vmul.f32 1.0, %v1031
      %v1033 = vrcp.pop %v863
      %v1034 = vmul.f32 %v863, %v1033
      %v1035 = vsub.f32 1.0, %v1034
      %v1036 = vmul.f32 %v1033, %v1035
      %v1037 = vadd.f32 %v1033, %v1036
      %vm1038 = vweird.f32 %v863
      %vm1039 = vweird.f32 %v1033
      %vm1040 = vmor %vm1038, %vm1039
      %v1041 = vsel %vm1040, %v1033, %v1037
      %v1042 = vand.u32 2147483647, %v863
      %vm1043 = vcmp.eq.f32.partialorder %v1042, 8.507059e+37
      %v1044 = vand.u32 %v863, 2147483648
      %v1045 = vor.u32 1.1754944e-38, %v1044
      %v1046 = vsel %vm1043, %v1045, %v1041
      %v1047 = vmul.f32 1.0, %v1046
      %v1048 = vrcp.pop %v864
      %v1049 = vmul.f32 %v864, %v1048
      %v1050 = vsub.f32 1.0, %v1049
      %v1051 = vmul.f32 %v1048, %v1050
      %v1052 = vadd.f32 %v1048, %v1051
      %vm1053 = vweird.f32 %v864
      %vm1054 = vweird.f32 %v1048
      %vm1055 = vmor %vm1053, %vm1054
      %v1056 = vsel %vm1055, %v1048, %v1052
      %v1057 = vand.u32 2147483647, %v864
      %vm1058 = vcmp.eq.f32.partialorder %v1057, 8.507059e+37
      %v1059 = vand.u32 %v864, 2147483648
      %v1060 = vor.u32 1.1754944e-38, %v1059
      %v1061 = vsel %vm1058, %v1060, %v1056
      %v1062 = vmul.f32 1.0, %v1061
      %v1063 = vrcp.pop %v865
      %v1064 = vmul.f32 %v865, %v1063
      %v1065 = vsub.f32 1.0, %v1064
      %v1066 = vmul.f32 %v1063, %v1065
      %v1067 = vadd.f32 %v1063, %v1066
      %vm1068 = vweird.f32 %v865
      %vm1069 = vweird.f32 %v1063
      %vm1070 = vmor %vm1068, %vm1069
      %v1071 = vsel %vm1070, %v1063, %v1067
      %v1072 = vand.u32 2147483647, %v865
      %vm1073 = vcmp.eq.f32.partialorder %v1072, 8.507059e+37
      %v1074 = vand.u32 %v865, 2147483648
      %v1075 = vor.u32 1.1754944e-38, %v1074
      %v1076 = vsel %vm1073, %v1075, %v1071
      %v1077 = vmul.f32 1.0, %v1076
      %v1078 = vrcp.pop %v866
      %v1079 = vmul.f32 %v866, %v1078
      %v1080 = vsub.f32 1.0, %v1079
      %v1081 = vmul.f32 %v1078, %v1080
      %v1082 = vadd.f32 %v1078, %v1081
      %vm1083 = vweird.f32 %v866
      %vm1084 = vweird.f32 %v1078
      %vm1085 = vmor %vm1083, %vm1084
      %v1086 = vsel %vm1085, %v1078, %v1082
      %v1087 = vand.u32 2147483647, %v866
      %vm1088 = vcmp.eq.f32.partialorder %v1087, 8.507059e+37
      %v1089 = vand.u32 %v866, 2147483648
      %v1090 = vor.u32 1.1754944e-38, %v1089
      %v1091 = vsel %vm1088, %v1090, %v1086
      %v1092 = vmul.f32 1.0, %v1091
      %v1093 = vrcp.pop %v867
      %v1094 = vmul.f32 %v867, %v1093
      %v1095 = vsub.f32 1.0, %v1094
      %v1096 = vmul.f32 %v1093, %v1095
      %v1097 = vadd.f32 %v1093, %v1096
      %vm1098 = vweird.f32 %v867
      %vm1099 = vweird.f32 %v1093
      %vm1100 = vmor %vm1098, %vm1099
      %v1101 = vsel %vm1100, %v1093, %v1097
      %v1102 = vand.u32 2147483647, %v867
      %vm1103 = vcmp.eq.f32.partialorder %v1102, 8.507059e+37
      %v1104 = vand.u32 %v867, 2147483648
      %v1105 = vor.u32 1.1754944e-38, %v1104
      %v1106 = vsel %vm1103, %v1105, %v1101
      %v1107 = vmul.f32 1.0, %v1106
      %v1108 = vmul.f32 %v788, %v882
      %v1109 = vmul.f32 %v789, %v897
      %v1110 = vmul.f32 %v790, %v912
      %v1111 = vmul.f32 %v791, %v927
      %v1112 = vmul.f32 %v792, %v942
      %v1113 = vmul.f32 %v793, %v957
      %v1114 = vmul.f32 %v794, %v972
      %v1115 = vmul.f32 %v795, %v987
      %v1116 = vmul.f32 %v796, %v1002
      %v1117 = vmul.f32 %v797, %v1017
      %v1118 = vmul.f32 %v798, %v1032
      %v1119 = vmul.f32 %v799, %v1047
      %v1120 = vmul.f32 %v800, %v1062
      %v1121 = vmul.f32 %v801, %v1077
      %v1122 = vmul.f32 %v802, %v1092
      %v1123 = vmul.f32 %v803, %v1107
      %1124 = vst [vmem:[%s296] sm:$0xff] %v1108
      %1125 = vst [vmem:[%s296 + $0x8] sm:$0xff] %v1109
      %1126 = vst [vmem:[%s296 + $0x10] sm:$0xff] %v1110
      %1127 = vst [vmem:[%s296 + $0x18] sm:$0xff] %v1111
      %1128 = vst [vmem:[%s296 + $0x20] sm:$0xff] %v1112
      %1129 = vst [vmem:[%s296 + $0x28] sm:$0xff] %v1113
      %1130 = vst [vmem:[%s296 + $0x30] sm:$0xff] %v1114
      %1131 = vst [vmem:[%s296 + $0x38] sm:$0xff] %v1115
      %1132 = vst [vmem:[%s296 + $0x40] sm:$0xff] %v1116
      %1133 = vst [vmem:[%s296 + $0x48] sm:$0xff] %v1117
      %1134 = vst [vmem:[%s296 + $0x50] sm:$0xff] %v1118
      %1135 = vst [vmem:[%s296 + $0x58] sm:$0xff] %v1119
      %1136 = vst [vmem:[%s296 + $0x60] sm:$0xff] %v1120
      %1137 = vst [vmem:[%s296 + $0x68] sm:$0xff] %v1121
      %1138 = vst [vmem:[%s296 + $0x70] sm:$0xff] %v1122
      %1139 = vst [vmem:[%s296 + $0x78] sm:$0xff] %v1123
      %s1140 = smul.u32 16, %s21
      %p1141 = scmp.lt.s32.totalorder %s20, 1
      %s1142 = scalar_select %p1141, %s20, 1
      %p1143 = scmp.lt.s32.totalorder %s1140, 31
      %s1144 = scalar_select %p1143, %s1140, 31
      %s1145 = smul.addr %s1142, 32
      %s1146 = sadd.s32 %s1144, %s1145
      %s1147 = smul.addr %s1146, 8
      %s1148 = scalar_lea.vmem %s5, %s1147
      // Predicated region
      $region41: #{_lambda_.1} parent=39 // pred_check
        %p1149 = pneg %p167
      $region42: #{_lambda_.1} parent=39 // pred_check_branch
        %1151 = sbr.rel (%p1149) target = $region44
      $region43: #{_lambda_.1} parent=39 // pred_region
        %s1152 = smul.u32 16, %s21
      $region44: #{_lambda_.1} parent=39 // pred_fallthru
        _
    $region40: #{_lambda_.1} parent=5 // pred_fallthru
      _
    %p1153 = scmp.le.s32.totalorder 2, %s11
    // Predicated region
    $region45: #{_lambda_.1} parent=5 // pred_check
      %p1154 = pneg %p1153
    $region46: #{_lambda_.1} parent=5 // pred_check_branch
      %1156 = sbr.rel (%p1154) target = $region48
    $region47: #{_lambda_.1} parent=5 // pred_region
      %s1157 = ssub.s32 %s11, 2
      // Predicated region
      $region49: #{_lambda_.1} parent=47 // pred_check
        %p1158 = pneg %p173
      $region50: #{_lambda_.1} parent=47 // pred_check_branch
        %1160 = sbr.rel (%p1158) target = $region52
      $region51: #{_lambda_.1} parent=47 // pred_region
        %s1161 = smul.u32 16, %s23
        %p1162 = scmp.lt.s32.totalorder %s22, 1
        %s1163 = scalar_select %p1162, %s22, 1
        %p1164 = scmp.lt.s32.totalorder %s1161, 31
        %s1165 = scalar_select %p1164, %s1161, 31
        %s1166 = smul.addr %s1163, 32
        %s1167 = sadd.s32 %s1165, %s1166
        %s1168 = smul.addr %s1167, 8
        %s1169 = scalar_lea.vmem %s5, %s1168
      $region52: #{_lambda_.1} parent=47 // pred_fallthru
        _
    $region48: #{_lambda_.1} parent=5 // pred_fallthru
      _
  $region6: #{_lambda_.1} parent=0 // loop_footer
    %s15 = sadd.s32 1, %s11
  $region7: #{_lambda_.1} parent=0 // loop_footer_branch
    %10 = sbr.rel target = $region3
  $region8: #{_lambda_.1} parent=0 // loop_exit
    _

</llo_original>
